<compile_context>
chip_gen: v7x
topology: tpu7x:2x2x1
jax: 0.10.0
libtpu: 0.0.40
codegen_flags: <defaults>
</compile_context>

<pallas_src>
import functools
import math

import jax
import jax.numpy as jnp
from jax.experimental import pallas as pl
from jax.experimental.pallas import tpu as pltpu


# ---------------------------------------------------------------------------
# Minimal irreps handling (deterministic, no e3nn dependency).
# An irreps spec is a list of (mul, l) pairs; dim = sum(mul * (2l + 1)).
# ---------------------------------------------------------------------------
def irreps_dim(irreps):
    return sum(mul * (2 * l + 1) for mul, l in irreps)


def make_output_mask(irreps, dtype=jnp.float32):
    # Identity's output_mask is all ones of length irreps.dim.
    return jnp.ones((irreps_dim(irreps),), dtype=dtype)


# ---------------------------------------------------------------------------
# Pallas kernel: identity copy of one (tile_rows, lane_width) VMEM tile.
# ---------------------------------------------------------------------------
def _identity_copy_kernel(x_ref, o_ref):
    o_ref[...] = x_ref[...]


# ---------------------------------------------------------------------------
# Hardware-aware tiling parameters.
# ---------------------------------------------------------------------------
def _detect_hw():
    """Returns (block_bytes, vmem_limit_bytes, num_tensorcores)."""
    kind = ""
    try:
        kind = jax.devices()[0].device_kind.lower()
    except Exception:
        pass
    if "v7" in kind:
        # 64 MiB physical VMEM, 2 TCs: 4 x 10 MiB double-buffered blocks
        # under a 48 MiB scoped cap leaves headroom.
        return 10 << 20, 48 << 20, 2
    if "v6" in kind:
        # 128 MiB physical VMEM: larger blocks amortize per-step overhead.
        return 12 << 20, 80 << 20, 1
    if "v5" in kind:
        return 8 << 20, 48 << 20, 1
    # Unknown / older generations: conservative defaults safe everywhere.
    return 8 << 20, 48 << 20, 1


_HW = _detect_hw()

# Widest lane-dense slab first: unmasked full-width vst + fewer, coarser DMAs.
_LANE_CANDIDATES = (32768, 16384, 8192, 4096, 2048, 1024, 512, 256, 128)


def _pick_lane_width(total, min_sublane):
    """Largest multiple-of-128 width dividing `total`, preferring widths that
    still leave >= min_sublane rows (so the row axis can be tiled)."""
    for w in _LANE_CANDIDATES:
        if total % w == 0 and total // w >= min_sublane:
            return w
    for w in _LANE_CANDIDATES:
        if total % w == 0:
            return w
    return None


def _row_tiling(rows, rows_per_block, min_sub, n_tc, total_bytes):
    """Choose (tile_rows, num_blocks) for the row axis."""
    # On 2-TC chips, medium/large copies should use >= 2 (even) blocks so the
    # "parallel" grid axis is balanced across both TensorCores.
    split_for_cores = n_tc >= 2 and total_bytes >= (1 << 20) and rows >= 2 * min_sub
    if rows <= min_sub or (rows <= rows_per_block and not split_for_cores):
        return rows, 1

    tile = max(min_sub, (min(rows_per_block, rows) // min_sub) * min_sub)
    nb = -(-rows // tile)  # ceil
    if (nb > 1 and nb % 2 == 1) or nb == 1:
        # Try to land on an even (>= 2) block count without wasting blocks.
        target = nb + 1
        cand = max(min_sub, ((-(-rows // target) + min_sub - 1) // min_sub) * min_sub)
        cand_nb = -(-rows // cand)
        if cand_nb % 2 == 0:
            tile, nb = cand, cand_nb
    return tile, nb


# ---------------------------------------------------------------------------
# Jitted explicit-copy path (reshape -> pallas copy -> reshape are fused by
# XLA into a single dispatch; reshapes are metadata-only bitcasts).
# ---------------------------------------------------------------------------
@functools.partial(jax.jit, static_argnames=("block_bytes",))
def _identity_copy(features, *, block_bytes=None):
    orig_shape = features.shape
    dtype = features.dtype
    itemsize = jnp.dtype(dtype).itemsize
    total = math.prod(orig_shape) if orig_shape else 1
    if total == 0:
        return features

    bb, vmem_limit, n_tc = _HW
    if block_bytes is not None:
        bb = int(block_bytes)

    # Minimum sublane multiple for tiled (non-full-array) blocks:
    # f32 -> 8, bf16 -> 16, int8/fp8 -> 32.
    min_sub = max(8, 32 // itemsize)

    lane_w = _pick_lane_width(total, min_sub)
    if lane_w is None:
        # Non-lane-dense fallback: single full-array 2-D block (block ==
        # array dims satisfies the (8,128) tiling rule regardless of size).
        if features.ndim >= 2:
            x2d = features.reshape(-1, orig_shape[-1])
        else:
            x2d = features.reshape(1, -1)
        rows, lane_w = x2d.shape
        tile_rows, num_blocks = rows, 1
    else:
        rows = total // lane_w
        x2d = features.reshape(rows, lane_w)
        rows_per_block = bb // (lane_w * itemsize)
        rows_per_block = max(min_sub, (rows_per_block // min_sub) * min_sub)
        tile_rows, num_blocks = _row_tiling(
            rows, rows_per_block, min_sub, n_tc, total * itemsize
        )

    out2d = pl.pallas_call(
        _identity_copy_kernel,
        out_shape=jax.ShapeDtypeStruct((rows, lane_w), dtype),
        grid_spec=pltpu.PrefetchScalarGridSpec(
            num_scalar_prefetch=0,
            grid=(num_blocks,),
            in_specs=[pl.BlockSpec((tile_rows, lane_w), lambda i: (i, 0))],
            out_specs=pl.BlockSpec((tile_rows, lane_w), lambda i: (i, 0)),
        ),
        # Advisory: zero compute, pure memory traffic (read + write).
        cost_estimate=pl.CostEstimate(
            flops=0, transcendentals=0, bytes_accessed=2 * total * itemsize
        ),
        compiler_params=pltpu.CompilerParams(
            # Grid iterations are fully independent -> shard across both
            # TensorCores on v7x; no-op on single-TC v5e/v6e.
            dimension_semantics=("parallel",),
            vmem_limit_bytes=vmem_limit,
        ),
    )(x2d)

    return out2d.reshape(orig_shape)


def identity_forward(features, *, copy=False, block_bytes=None):
    """Identity.forward(features).

    Default (copy=False): returns the input unchanged — semantically exact
    and zero HBM traffic, matching e3nn's `return features`.
    copy=True: produces a fresh buffer via the Pallas copy kernel (HBM
    roofline copy; used when an explicit new buffer is required).
    """
    if not copy:
        return features
    return _identity_copy(features, block_bytes=block_bytes)


class Identity:
    """JAX/Pallas port of e3nn.nn.Identity."""

    def __init__(self, irreps_in, irreps_out):
        # irreps given as list of (mul, l) pairs; equality check mirrors e3nn.
        self.irreps_in = tuple(irreps_in)
        self.irreps_out = tuple(irreps_out)
        assert self.irreps_in == self.irreps_out
        self.output_mask = make_output_mask(self.irreps_out)

    def __repr__(self):
        return f"{self.__class__.__name__}({self.irreps_in} -> {self.irreps_out})"

    def __call__(self, features):
        # TODO(synk): torch's @compile_mode('trace') decoration has no JAX
        # equivalent; forward semantics are preserved exactly.
        return identity_forward(features)


if __name__ == "__main__":
    # irreps = "4x0e + 4x1o" -> dim = 4*1 + 4*3 = 16
    irreps = [(4, 0), (4, 1)]
    mod = Identity(irreps, irreps)
    dim = irreps_dim(irreps)

    key = jax.random.PRNGKey(0)
    k1, k2, k3 = jax.random.split(key, 3)

    # 1) Canonical e3nn forward: fast path, returns the input unchanged.
    x1 = jax.random.normal(k1, (8, dim), dtype=jnp.float32)
    y1 = mod(x1)

    # 2) Explicit-copy path, small lane-dense single block (1, 128).
    y1c = identity_forward(x1, copy=True)

    # 3) Explicit-copy path exercising the tiled lane-dense grid:
    #    (1024, 512) f32 -> (16, 32768) slab, 128 KiB blocks -> grid=(2,).
    x2 = jax.random.normal(k2, (1024, 512), dtype=jnp.float32)
    y2 = identity_forward(x2, copy=True, block_bytes=128 * 1024)

    # 4) Non-lane-dense fallback (single full-array block).
    x3 = jax.random.normal(k3, (5, 7), dtype=jnp.float32)
    y3 = identity_forward(x3, copy=True)

    jax.block_until_ready((y1, y1c, y2, y3))

    # Fast path is an exact identity (same array object, no copy).
    assert y1 is x1
    for x, y in ((x1, y1c), (x2, y2), (x3, y3)):
        assert y.shape == x.shape and y.dtype == x.dtype
        assert bool(jnp.all(y == x))
    assert mod.output_mask.shape == (dim,)
    assert bool(jnp.all(mod.output_mask == 1.0))

    print("KERNEL_OK")
</pallas_src>

<mosaic_0001>
module attributes {stable_mosaic.version = 11 : i64} {
  func.func @_identity_copy_kernel(%arg0: i32, %arg1: memref<1x128xf32, #tpu.memory_space<vmem>>, %arg2: memref<1x128xf32, #tpu.memory_space<vmem>>) attributes {dimension_semantics = [#tpu.dimension_semantics<parallel>], iteration_bounds = array<i64: 1>, scalar_prefetch = 0 : i64, scratch_operands = 0 : i64, tpu.core_type = #tpu.core_type<tc>, window_params = [{transform_indices = @transform_0, window_bounds = array<i64: 1, 128>}, {transform_indices = @transform_1, window_bounds = array<i64: 1, 128>}]} {
    %c0 = arith.constant 0 : index
    %c0_0 = arith.constant 0 : index
    %0 = vector.load %arg1[%c0, %c0_0] : memref<1x128xf32, #tpu.memory_space<vmem>>, vector<1x128xf32>
    %c0_1 = arith.constant 0 : index
    %c0_2 = arith.constant 0 : index
    %1 = vector.load %arg2[%c0_1, %c0_2] : memref<1x128xf32, #tpu.memory_space<vmem>>, vector<1x128xf32>
    tpu.vector_store %arg2[%c0_1, %c0_2], %0 {strides = array<i32>} : memref<1x128xf32, #tpu.memory_space<vmem>>, vector<1x128xf32>,
    return
  }
  func.func @transform_0(%arg0: i32) -> (i32, i32) {
    %c0_i32 = arith.constant 0 : i32
    %c0_i32_0 = arith.constant 0 : i32
    return %arg0, %c0_i32 : i32, i32
  }
  func.func @transform_1(%arg0: i32) -> (i32, i32) {
    %c0_i32 = arith.constant 0 : i32
    %c0_i32_0 = arith.constant 0 : i32
    return %arg0, %c0_i32 : i32, i32
  }
}

</mosaic_0001>

<llo_original>
// kernel: _identity_copy.1
$region0: #{_identity_copy.1}
  #allocation0 [shape = 'u32[]', space=smem, size = 0x4, offset = 0x4, fixed_abs, tag = 'smem constant byte address 0x4 - core index']
  #allocation1 [shape = 'u32[144,128]{1,0:T(1,128)}', space=vmem, size = 0x12000, scoped, tag = 'internal scratch']
  %s0 = inlined_call_operand.vmem [shape: f32[1,128], index: 0, kind: input, shape index: {}]
  %s1 = inlined_call_operand.vmem [shape: f32[1,128], index: 1, kind: output, shape index: {}]
  %s2 = sld [smem:[#allocation0]]
  $region14: #{_identity_copy.1} parent=0
    _
  %s4 = ssub.s32 1, %s2
  %s5 = scalar_select 0, %s4, %s2
  // Predicated region
  $region2: #{_identity_copy.1} parent=0 // pred_check
    _
  $region3: #{_identity_copy.1} parent=0 // pred_check_branch
    %7 = sbr.rel (0) target = $region5
  $region4: #{_identity_copy.1} parent=0 // pred_region
    _
  $region5: #{_identity_copy.1} parent=0 // pred_fallthru
    _
  %v8 = vld [vmem:[%s0] sm:$0x1]
  %9 = vst [vmem:[%s1] sm:$0x1] %v8
  // Predicated region
  $region6: #{_identity_copy.1} parent=0 // pred_check
    _
  $region7: #{_identity_copy.1} parent=0 // pred_check_branch
    %11 = sbr.rel (0) target = $region9
  $region8: #{_identity_copy.1} parent=0 // pred_region
    _
  $region9: #{_identity_copy.1} parent=0 // pred_fallthru
    _
  // Predicated region
  $region10: #{_identity_copy.1} parent=0 // pred_check
    _
  $region11: #{_identity_copy.1} parent=0 // pred_check_branch
    %13 = sbr.rel (0) target = $region13
  $region12: #{_identity_copy.1} parent=0 // pred_region
    _
  $region13: #{_identity_copy.1} parent=0 // pred_fallthru
    _

</llo_original>
